<compile_context>
chip_gen: v5e
topology: v5e:2x2
jax: 0.10.0
libtpu: 0.0.40
codegen_flags: <defaults>
</compile_context>

<pallas_src>
import functools

import jax
import jax.numpy as jnp
from jax import lax
from jax.experimental import pallas as pl
from jax.experimental.pallas import tpu as pltpu


# -----------------------------------------------------------------------------
# Kernel
# -----------------------------------------------------------------------------
def _rnn_fused_seq_kernel(x_ref, h0_ref, win_ref, whid_ref, b_ref,
                          y_ref, h_carry, *, chunk, unroll):
    """One time-chunk of the fused recurrence.

    y_t = [h_{t+1} | o_t] = (x_t @ W_in + b) + y_{t-1} @ W_hid_pad
    where W_hid_pad has zero rows for the output lanes of the carry.
    The full (chunk, H+O) slab is written lane-dense to y_ref.
    """
    c = pl.program_id(0)

    # Initialize the cross-chunk carry with [h0 | 0] on the first chunk.
    @pl.when(c == 0)
    def _():
        h_carry[...] = h0_ref[...]

    # Hoisted non-recurrent part for the whole chunk: one batched matmul
    # (chunk, I) @ (I, H+O) + bias, written straight into the output slab.
    y_ref[...] = (
        jnp.dot(x_ref[...], win_ref[...], preferred_element_type=jnp.float32)
        + b_ref[...]
    )

    whid = whid_ref[...]  # (H+O, H+O), bottom O rows are zero.

    # Serial recurrence: read u_t back from the slab, add the recurrent term,
    # overwrite the row with the finished fused vector.
    def step(t, y_prev):
        row = pl.ds(t, 1)
        y = y_ref[row, :] + jnp.dot(y_prev, whid,
                                    preferred_element_type=jnp.float32)
        y_ref[row, :] = y
        return y

    y_last = lax.fori_loop(0, chunk, step, h_carry[...], unroll=unroll)
    h_carry[...] = y_last  # carry [h_T | o_{T-1}] into the next chunk


# -----------------------------------------------------------------------------
# Wrappers
# -----------------------------------------------------------------------------
def bsec_rnn_old_scan(xs, h0, params, *, hidden_size, time_chunk=None):
    """Run the cell over a sequence xs: (T, I).

    Returns (outputs (T, O), final_hidden (H,)). Single pallas_call: weights
    stay VMEM-resident, the recurrence runs inside the kernel in time chunks.
    """
    w_in, w_hid_pad, b = params["w_in"], params["w_hid_pad"], params["b"]
    input_size, ho = w_in.shape
    output_size = ho - hidden_size
    seq_len = xs.shape[0]

    # Time-chunk size: one chunk for short sequences, otherwise a multiple of 8.
    if time_chunk is None:
        time_chunk = seq_len if seq_len <= 256 else 256
    chunk = time_chunk
    num_chunks = pl.cdiv(seq_len, chunk)
    t_pad = num_chunks * chunk
    if t_pad != seq_len:
        xs = jnp.concatenate(
            [xs, jnp.zeros((t_pad - seq_len, input_size), xs.dtype)], axis=0)

    # Fused carry vector [h0 | zeros] of width H+O.
    h0_pad = jnp.concatenate(
        [h0.astype(jnp.float32), jnp.zeros((output_size,), jnp.float32)]
    ).reshape(1, ho)

    unroll = True if chunk <= 32 else 8
    kernel = functools.partial(_rnn_fused_seq_kernel, chunk=chunk,
                               unroll=unroll)

    flops = 2 * t_pad * (input_size * ho + ho * ho)
    bytes_accessed = 4 * (t_pad * input_size + t_pad * ho
                          + input_size * ho + ho * ho + 2 * ho)

    ys = pl.pallas_call(
        kernel,
        out_shape=jax.ShapeDtypeStruct((t_pad, ho), jnp.float32),
        grid=(num_chunks,),
        in_specs=[
            pl.BlockSpec((chunk, input_size), lambda c: (c, 0)),   # x chunk
            pl.BlockSpec((1, ho), lambda c: (0, 0)),               # h0_pad
            pl.BlockSpec((input_size, ho), lambda c: (0, 0)),      # W_in
            pl.BlockSpec((ho, ho), lambda c: (0, 0)),              # W_hid_pad
            pl.BlockSpec((1, ho), lambda c: (0, 0)),               # bias
        ],
        out_specs=pl.BlockSpec((chunk, ho), lambda c: (c, 0)),     # fused slab
        scratch_shapes=[pltpu.VMEM((1, ho), jnp.float32)],         # carry
        compiler_params=pltpu.CompilerParams(
            dimension_semantics=("arbitrary",)),  # sequential recurrence
        cost_estimate=pl.CostEstimate(flops=flops, transcendentals=0,
                                      bytes_accessed=bytes_accessed),
    )(xs, h0_pad, w_in, w_hid_pad, b)

    # Row t of the slab is [h_{t+1} | o_t]; slicing here is free plumbing.
    outputs = ys[:seq_len, hidden_size:]            # (T, O)
    final_hidden = ys[seq_len - 1, :hidden_size]    # (H,)
    return outputs, final_hidden


def bsec_rnn_old_forward(inp, hidden, params, *, hidden_size):
    """One step of BSEC_RNN_OLD (matches the PyTorch forward).

    Returns (output (O,), new_hidden (H,)). Routed through the fused sequence
    kernel with T=1 so there is a single code path.
    """
    outs, new_hidden = bsec_rnn_old_scan(
        inp.reshape(1, -1), hidden, params, hidden_size=hidden_size)
    return outs[0], new_hidden


# -----------------------------------------------------------------------------
# Parameter handling
# -----------------------------------------------------------------------------
def init_params(key, input_size, hidden_size, output_size):
    """PyTorch-layout params, U(-1/sqrt(fan_in), +) like nn.Linear."""
    comb = input_size + hidden_size
    k1, k2, k3, k4 = jax.random.split(key, 4)
    bound = 1.0 / jnp.sqrt(jnp.float32(comb))
    return {
        "i2h_w": jax.random.uniform(k1, (hidden_size, comb), jnp.float32,
                                    -bound, bound),
        "i2h_b": jax.random.uniform(k2, (hidden_size,), jnp.float32,
                                    -bound, bound),
        "i2o_w": jax.random.uniform(k3, (output_size, comb), jnp.float32,
                                    -bound, bound),
        "i2o_b": jax.random.uniform(k4, (output_size,), jnp.float32,
                                    -bound, bound),
    }


def prepare_params(raw):
    """One-time layout work: transpose + fuse i2h/i2o, pad the recurrent slab.

    Returns arrays such that
      [new_hidden | output] = x @ w_in + [hidden | *] @ w_hid_pad + b
    where w_hid_pad's trailing O rows are zero (so any carried output lanes
    are ignored — no per-step lane slicing needed in the kernel).
    """
    i2h_w, i2h_b = raw["i2h_w"], raw["i2h_b"]   # (H, C), (H,)
    i2o_w, i2o_b = raw["i2o_w"], raw["i2o_b"]   # (O, C), (O,)
    hidden_size = i2h_w.shape[0]
    output_size = i2o_w.shape[0]
    comb = i2h_w.shape[1]
    input_size = comb - hidden_size
    ho = hidden_size + output_size

    w_fused = jnp.concatenate([i2h_w.T, i2o_w.T], axis=1)     # (C, H+O)
    w_in = w_fused[:input_size]                               # (I, H+O)
    w_hid = w_fused[input_size:]                              # (H, H+O)
    w_hid_pad = jnp.concatenate(
        [w_hid, jnp.zeros((output_size, ho), w_hid.dtype)], axis=0)  # (H+O, H+O)
    b = jnp.concatenate([i2h_b, i2o_b]).reshape(1, ho)        # (1, H+O)
    return {"w_in": w_in, "w_hid_pad": w_hid_pad, "b": b}


def init_hidden(hidden_size):
    return jnp.zeros((hidden_size,), jnp.float32)


# -----------------------------------------------------------------------------
# Test
# -----------------------------------------------------------------------------
if __name__ == "__main__":
    input_size, hidden_size, output_size, seq_len = 4, 32, 4, 8

    key = jax.random.PRNGKey(0)
    pkey, xkey = jax.random.split(key)
    raw_params = init_params(pkey, input_size, hidden_size, output_size)
    params = prepare_params(raw_params)   # layout work done once, not per call

    xs = jax.random.normal(xkey, (seq_len, input_size), jnp.float32)
    h0 = init_hidden(hidden_size)

    # --- single-step forward (matches the PyTorch module's forward) ---------
    output, new_hidden = bsec_rnn_old_forward(xs[0], h0, params,
                                              hidden_size=hidden_size)
    jax.block_until_ready((output, new_hidden))

    combined = jnp.concatenate([xs[0], h0])
    ref_hidden = combined @ raw_params["i2h_w"].T + raw_params["i2h_b"]
    ref_output = combined @ raw_params["i2o_w"].T + raw_params["i2o_b"]

    assert output.shape == (output_size,)
    assert new_hidden.shape == (hidden_size,)
    assert jnp.allclose(output, ref_output, atol=1e-5)
    assert jnp.allclose(new_hidden, ref_hidden, atol=1e-5)

    # --- fused sequence variant (time loop inside the kernel) ---------------
    outs, h_n = bsec_rnn_old_scan(xs, h0, params, hidden_size=hidden_size)
    jax.block_until_ready((outs, h_n))

    ref_h = h0
    ref_outs = []
    for t in range(seq_len):
        c = jnp.concatenate([xs[t], ref_h])
        ref_outs.append(c @ raw_params["i2o_w"].T + raw_params["i2o_b"])
        ref_h = c @ raw_params["i2h_w"].T + raw_params["i2h_b"]
    ref_outs = jnp.stack(ref_outs)

    assert outs.shape == (seq_len, output_size)
    assert h_n.shape == (hidden_size,)
    assert jnp.allclose(outs, ref_outs, atol=1e-5)
    assert jnp.allclose(h_n, ref_h, atol=1e-5)

    print("KERNEL_OK")
</pallas_src>

<mosaic_0001>
module attributes {stable_mosaic.version = 11 : i64} {
  func.func @_rnn_fused_seq_kernel(%arg0: i32, %arg1: memref<1x4xf32, #tpu.memory_space<vmem>>, %arg2: memref<1x36xf32, #tpu.memory_space<vmem>>, %arg3: memref<4x36xf32, #tpu.memory_space<vmem>>, %arg4: memref<36x36xf32, #tpu.memory_space<vmem>>, %arg5: memref<1x36xf32, #tpu.memory_space<vmem>>, %arg6: memref<1x36xf32, #tpu.memory_space<vmem>>, %arg7: memref<1x36xf32, #tpu.memory_space<vmem>>) attributes {dimension_semantics = [#tpu.dimension_semantics<arbitrary>], iteration_bounds = array<i64: 1>, scalar_prefetch = 0 : i64, scratch_operands = 1 : i64, tpu.core_type = #tpu.core_type<tc>, window_params = [{transform_indices = @transform_0, window_bounds = array<i64: 1, 4>}, {pipeline_mode = #tpu.pipeline_mode<synchronous>, transform_indices = @transform_1, window_bounds = array<i64: 1, 36>}, {pipeline_mode = #tpu.pipeline_mode<synchronous>, transform_indices = @transform_2, window_bounds = array<i64: 4, 36>}, {pipeline_mode = #tpu.pipeline_mode<synchronous>, transform_indices = @transform_3, window_bounds = array<i64: 36, 36>}, {pipeline_mode = #tpu.pipeline_mode<synchronous>, transform_indices = @transform_4, window_bounds = array<i64: 1, 36>}, {transform_indices = @transform_5, window_bounds = array<i64: 1, 36>}]} {
    %c0_i32 = arith.constant 0 : i32
    %0 = arith.cmpi eq, %arg0, %c0_i32 : i32
    %1 = arith.extui %0 : i1 to i32
    %c0_i32_0 = arith.constant 0 : i32
    %2 = arith.cmpi ne, %1, %c0_i32_0 : i32
    scf.if %2 {
      %c0_18 = arith.constant 0 : index
      %c0_19 = arith.constant 0 : index
      %18 = vector.load %arg2[%c0_18, %c0_19] : memref<1x36xf32, #tpu.memory_space<vmem>>, vector<1x36xf32>
      %c0_20 = arith.constant 0 : index
      %c0_21 = arith.constant 0 : index
      %19 = vector.load %arg7[%c0_20, %c0_21] : memref<1x36xf32, #tpu.memory_space<vmem>>, vector<1x36xf32>
      tpu.vector_store %arg7[%c0_20, %c0_21], %18 {strides = array<i32>} : memref<1x36xf32, #tpu.memory_space<vmem>>, vector<1x36xf32>,
    } else {
    }
    %c0 = arith.constant 0 : index
    %c0_1 = arith.constant 0 : index
    %3 = vector.load %arg1[%c0, %c0_1] : memref<1x4xf32, #tpu.memory_space<vmem>>, vector<1x4xf32>
    %c0_2 = arith.constant 0 : index
    %c0_3 = arith.constant 0 : index
    %4 = vector.load %arg3[%c0_2, %c0_3] : memref<4x36xf32, #tpu.memory_space<vmem>>, vector<4x36xf32>
    %cst = arith.constant dense<0.000000e+00> : vector<1x36xf32>
    %5 = tpu.matmul %3, %4, %cst {dimension_numbers = #tpu.dot_dimension_numbers<[1], [0], [0], [1], [0, 0, 1, 1], [], []>} : vector<1x4xf32>, vector<4x36xf32>, vector<1x36xf32> -> vector<1x36xf32>
    %c0_4 = arith.constant 0 : index
    %c0_5 = arith.constant 0 : index
    %6 = vector.load %arg5[%c0_4, %c0_5] : memref<1x36xf32, #tpu.memory_space<vmem>>, vector<1x36xf32>
    %7 = arith.addf %5, %6 : vector<1x36xf32>
    %c0_6 = arith.constant 0 : index
    %c0_7 = arith.constant 0 : index
    %8 = vector.load %arg6[%c0_6, %c0_7] : memref<1x36xf32, #tpu.memory_space<vmem>>, vector<1x36xf32>
    tpu.vector_store %arg6[%c0_6, %c0_7], %7 {strides = array<i32>} : memref<1x36xf32, #tpu.memory_space<vmem>>, vector<1x36xf32>,
    %c0_8 = arith.constant 0 : index
    %c0_9 = arith.constant 0 : index
    %9 = vector.load %arg4[%c0_8, %c0_9] : memref<36x36xf32, #tpu.memory_space<vmem>>, vector<36x36xf32>
    %c0_10 = arith.constant 0 : index
    %c0_11 = arith.constant 0 : index
    %10 = vector.load %arg7[%c0_10, %c0_11] : memref<1x36xf32, #tpu.memory_space<vmem>>, vector<1x36xf32>
    %c0_i32_12 = arith.constant 0 : i32
    %11 = arith.index_cast %c0_i32_12 : i32 to index
    %c0_13 = arith.constant 0 : index
    %12 = vector.load %arg6[%11, %c0_13] : memref<1x36xf32, #tpu.memory_space<vmem>>, vector<1x36xf32>
    %cst_14 = arith.constant dense<0.000000e+00> : vector<1x36xf32>
    %13 = tpu.matmul %10, %9, %cst_14 {dimension_numbers = #tpu.dot_dimension_numbers<[1], [0], [0], [1], [0, 0, 1, 1], [], []>} : vector<1x36xf32>, vector<36x36xf32>, vector<1x36xf32> -> vector<1x36xf32>
    %14 = arith.addf %12, %13 : vector<1x36xf32>
    %15 = arith.index_cast %c0_i32_12 : i32 to index
    %c0_15 = arith.constant 0 : index
    %16 = vector.load %arg6[%15, %c0_15] : memref<1x36xf32, #tpu.memory_space<vmem>>, vector<1x36xf32>
    tpu.vector_store %arg6[%15, %c0_15], %14 {strides = array<i32>} : memref<1x36xf32, #tpu.memory_space<vmem>>, vector<1x36xf32>,
    %c1_i32 = arith.constant 1 : i32
    %c0_16 = arith.constant 0 : index
    %c0_17 = arith.constant 0 : index
    %17 = vector.load %arg7[%c0_16, %c0_17] : memref<1x36xf32, #tpu.memory_space<vmem>>, vector<1x36xf32>
    tpu.vector_store %arg7[%c0_16, %c0_17], %14 {strides = array<i32>} : memref<1x36xf32, #tpu.memory_space<vmem>>, vector<1x36xf32>,
    return
  }
  func.func @transform_0(%arg0: i32) -> (i32, i32) {
    %c0_i32 = arith.constant 0 : i32
    %c0_i32_0 = arith.constant 0 : i32
    return %arg0, %c0_i32 : i32, i32
  }
  func.func @transform_1(%arg0: i32) -> (i32, i32) {
    %c0_i32 = arith.constant 0 : i32
    %c0_i32_0 = arith.constant 0 : i32
    %c0_i32_1 = arith.constant 0 : i32
    return %c0_i32, %c0_i32_0 : i32, i32
  }
  func.func @transform_2(%arg0: i32) -> (i32, i32) {
    %c0_i32 = arith.constant 0 : i32
    %c0_i32_0 = arith.constant 0 : i32
    %c0_i32_1 = arith.constant 0 : i32
    return %c0_i32, %c0_i32_0 : i32, i32
  }
  func.func @transform_3(%arg0: i32) -> (i32, i32) {
    %c0_i32 = arith.constant 0 : i32
    %c0_i32_0 = arith.constant 0 : i32
    %c0_i32_1 = arith.constant 0 : i32
    return %c0_i32, %c0_i32_0 : i32, i32
  }
  func.func @transform_4(%arg0: i32) -> (i32, i32) {
    %c0_i32 = arith.constant 0 : i32
    %c0_i32_0 = arith.constant 0 : i32
    %c0_i32_1 = arith.constant 0 : i32
    return %c0_i32, %c0_i32_0 : i32, i32
  }
  func.func @transform_5(%arg0: i32) -> (i32, i32) {
    %c0_i32 = arith.constant 0 : i32
    %c0_i32_0 = arith.constant 0 : i32
    return %arg0, %c0_i32 : i32, i32
  }
}

</mosaic_0001>

<llo_original>
// kernel: tpu_custom_call.1
$region0: #{tpu_custom_call.1}
  #allocation0 [shape = 'u32[]', space=smem, size = 0x4, offset = 0x4, fixed_abs, tag = 'smem constant byte address 0x4 - core index']
  #allocation1 [shape = 'u32[72,128]{1,0:T(1,128)}', space=vmem, size = 0x9000, scoped, tag = 'internal scratch']
  #allocation2 [shape = 'f32[1,36]{1,0:T(1,128)}', space=vmem, size = 0x200, scoped, tag = 'scratch operand']
  %s0 = inlined_call_operand.hbm [shape: f32[1,4], index: 0, kind: input, shape index: {}]
  %s1 = inlined_call_operand.hbm [shape: f32[1,36], index: 1, kind: input, shape index: {}]
  %s2 = inlined_call_operand.hbm [shape: f32[4,36], index: 2, kind: input, shape index: {}]
  %s3 = inlined_call_operand.hbm [shape: f32[36,36], index: 3, kind: input, shape index: {}]
  %s4 = inlined_call_operand.vmem [shape: f32[1,36], index: 4, kind: input, shape index: {}]
  %s5 = inlined_call_operand.hbm [shape: f32[1,36], index: 5, kind: output, shape index: {}]
  %s6 = sld [smem:[#allocation0]]
  $region50: #{tpu_custom_call.1} parent=0
    _
  %s8 = ssub.s32 1, %s6
  %s9 = scalar_select 0, %s8, %s6
  $region1: #{tpu_custom_call.1} parent=0
    #allocation3 [shape = 'u8[512]{0}', space=vmem, size = 0x400, scoped, tag = 'input window, operand 0, single buffered']
    #allocation4 [shape = 's32[1]{0}', space=sflag, size = 0x4, scoped, tag = 'scoped memory for tpu_custom_call.1']
    #allocation5 [shape = 's32[1]{0}', space=sflag, size = 0x4, scoped, tag = 'scoped memory for tpu_custom_call.1']
    #allocation6 [shape = 'u8[512]{0}', space=vmem, size = 0x400, scoped, tag = 'input window, operand 1, single buffered']
    #allocation7 [shape = 's32[1]{0}', space=sflag, size = 0x4, scoped, tag = 'scoped memory for tpu_custom_call.1']
    #allocation8 [shape = 'u8[2048]{0}', space=vmem, size = 0x800, scoped, tag = 'input window, operand 2, single buffered']
    #allocation9 [shape = 'u8[20480]{0}', space=vmem, size = 0x5000, scoped, tag = 'input window, operand 3, single buffered']
    #allocation10 [shape = 's32[1]{0}', space=sflag, size = 0x4, scoped, tag = 'scoped memory for tpu_custom_call.1']
    #allocation11 [shape = 'u8[512]{0}', space=vmem, size = 0x400, scoped, tag = 'output window, operand 0, single buffered']
    %10 = vsyncpa [#allocation4], 0
    %11 = vsyncpa [#allocation7], 0
    %12 = vsyncpa [#allocation10], 0
    %13 = vsyncpa [#allocation5], 0
    // Predicated region
    $region2: #{tpu_custom_call.1} parent=1 // pred_check
      _
    $region3: #{tpu_custom_call.1} parent=1 // pred_check_branch
      %15 = sbr.rel (0) target = $region5
    $region4: #{tpu_custom_call.1} parent=1 // pred_region
      %17 = vsyncadd [#allocation4], 0
      %s19 = sshll.u32 %s0, 4
      %s20 = int_to_ptr.hbm [resolvable:$true] %s19
      %s21 = sshll.u32 [#allocation3], 4
      %s22 = int_to_ptr.vmem [resolvable:$true] %s21
      %24 = dma.hbm_to_vmem [thread:$0]  %s20, 16, %s22, [#allocation4]
    $region5: #{tpu_custom_call.1} parent=1 // pred_fallthru
      _
    // Predicated region
    $region6: #{tpu_custom_call.1} parent=1 // pred_check
      _
    $region7: #{tpu_custom_call.1} parent=1 // pred_check_branch
      %26 = sbr.rel (0) target = $region9
    $region8: #{tpu_custom_call.1} parent=1 // pred_region
      %28 = vsyncadd [#allocation7], 0
      %s30 = sshll.u32 %s1, 4
      %s31 = int_to_ptr.hbm [resolvable:$true] %s30
      %s32 = sshll.u32 [#allocation6], 4
      %s33 = int_to_ptr.vmem [resolvable:$true] %s32
      %35 = dma.hbm_to_vmem [thread:$0]  %s31, 16, %s33, [#allocation7]
    $region9: #{tpu_custom_call.1} parent=1 // pred_fallthru
      _
    // Predicated region
    $region10: #{tpu_custom_call.1} parent=1 // pred_check
      _
    $region11: #{tpu_custom_call.1} parent=1 // pred_check_branch
      %37 = sbr.rel (0) target = $region13
    $region12: #{tpu_custom_call.1} parent=1 // pred_region
      %39 = vsyncadd [#allocation7], 0
      %s41 = sshll.u32 %s2, 4
      %s42 = int_to_ptr.hbm [resolvable:$true] %s41
      %s43 = sshll.u32 [#allocation8], 4
      %s44 = int_to_ptr.vmem [resolvable:$true] %s43
      %46 = dma.hbm_to_vmem [thread:$0]  %s42, 64, %s44, [#allocation7]
    $region13: #{tpu_custom_call.1} parent=1 // pred_fallthru
      _
    // Predicated region
    $region14: #{tpu_custom_call.1} parent=1 // pred_check
      _
    $region15: #{tpu_custom_call.1} parent=1 // pred_check_branch
      %48 = sbr.rel (0) target = $region17
    $region16: #{tpu_custom_call.1} parent=1 // pred_region
      %50 = vsyncadd [#allocation10], 0
      %s51 = sshll.u32 %s3, 4
      %s52 = int_to_ptr.hbm [resolvable:$true] %s51
      %s53 = sshll.u32 [#allocation9], 4
      %s54 = int_to_ptr.vmem [resolvable:$true] %s53
      %59 = dma.hbm_to_vmem [thread:$0]  %s52, 640, %s54, [#allocation10], 128, 128, 8
    $region17: #{tpu_custom_call.1} parent=1 // pred_fallthru
      _
    // Predicated region
    $region18: #{tpu_custom_call.1} parent=1 // pred_check
      _
    $region19: #{tpu_custom_call.1} parent=1 // pred_check_branch
      %61 = sbr.rel (0) target = $region21
    $region20: #{tpu_custom_call.1} parent=1 // pred_region
      _
    $region21: #{tpu_custom_call.1} parent=1 // pred_fallthru
      _
    // Predicated region
    $region22: #{tpu_custom_call.1} parent=1 // pred_check
      _
    $region23: #{tpu_custom_call.1} parent=1 // pred_check_branch
      %63 = sbr.rel (0) target = $region25
    $region24: #{tpu_custom_call.1} parent=1 // pred_region
      %65 = dma.done [#allocation4], 16
    $region25: #{tpu_custom_call.1} parent=1 // pred_fallthru
      _
    // Predicated region
    $region26: #{tpu_custom_call.1} parent=1 // pred_check
      _
    $region27: #{tpu_custom_call.1} parent=1 // pred_check_branch
      %67 = sbr.rel (0) target = $region29
    $region28: #{tpu_custom_call.1} parent=1 // pred_region
      %69 = dma.done [#allocation7], 16
    $region29: #{tpu_custom_call.1} parent=1 // pred_fallthru
      _
    // Predicated region
    $region30: #{tpu_custom_call.1} parent=1 // pred_check
      _
    $region31: #{tpu_custom_call.1} parent=1 // pred_check_branch
      %71 = sbr.rel (0) target = $region33
    $region32: #{tpu_custom_call.1} parent=1 // pred_region
      %73 = dma.done [#allocation7], 64
    $region33: #{tpu_custom_call.1} parent=1 // pred_fallthru
      _
    // Predicated region
    $region34: #{tpu_custom_call.1} parent=1 // pred_check
      _
    $region35: #{tpu_custom_call.1} parent=1 // pred_check_branch
      %75 = sbr.rel (0) target = $region37
    $region36: #{tpu_custom_call.1} parent=1 // pred_region
      %77 = dma.done [#allocation10], 640
    $region37: #{tpu_custom_call.1} parent=1 // pred_fallthru
      _
    %p78 = scmp.eq.s32.totalorder 0, 0
    // Predicated region
    $region38: #{tpu_custom_call.1} parent=1 // pred_check
      %p79 = pneg %p78
    $region39: #{tpu_custom_call.1} parent=1 // pred_check_branch
      %81 = sbr.rel (%p79) target = $region41
    $region40: #{tpu_custom_call.1} parent=1 // pred_region
      %v82 = vld [vmem:[#allocation6] sm:$0x1]
      %vm83 = vcmask 286720
      %84 = vst.msk [vmem:[#allocation2] sm:$0x1] %vm83, %v82
    $region41: #{tpu_custom_call.1} parent=1 // pred_fallthru
      _
    %v85 = vld [vmem:[#allocation3] sm:$0x1]
    %v86 = vld [vmem:[#allocation8] sm:$0xf]
    %v87 = vld [vmem:[%s4] sm:$0x1]
    %vm88 = vcmask 31744
    %v90 = vsel %vm88, %v85, 0
    %vm92 = vcmask 1043456
    %v94 = vsel %vm92, %v86, 0
    %96 = vmatpush.msra.mxu0 0.0
    %97 = vmatpush.msra.mxu0 0.0
    %98 = vmatpush.msra.mxu0 0.0
    %99 = vmatpush.msra.mxu0 0.0
    %100 = vmatpush.msra.mxu0 0.0
    %101 = vmatpush.msra.mxu0 0.0
    %102 = vmatpush.msra.mxu0 0.0
    %103 = vmatpush.msra.mxu0 0.0
    %104 = vmatpush.msra.mxu0 0.0
    %105 = vmatpush.msra.mxu0 0.0
    %106 = vmatpush.msra.mxu0 0.0
    %107 = vmatpush.msra.mxu0 0.0
    %108 = vmatpush.msra.mxu0 0.0
    %109 = vmatpush.msra.mxu0 0.0
    %110 = vmatpush.msra.mxu0 0.0
    %111 = vmatpush.msra.mxu0 %v94
    %112 = vmatmul.f32.gmra.mxu0 %v90
    %v113 = vpop.f32.mrf.mxu0
    %v114 = vadd.f32 %v87, %v113
    %115 = vdwg.mxu0
    %vm116 = vcmask 286720
    %117 = vst.msk [vmem:[#allocation11] sm:$0x1] %vm116, %v114
    %v118 = vld [vmem:[#allocation9] sm:$0xff]
    %v119 = vld [vmem:[#allocation9 + $0x8] sm:$0xff]
    %v120 = vld [vmem:[#allocation9 + $0x10] sm:$0xff]
    %v121 = vld [vmem:[#allocation9 + $0x18] sm:$0xff]
    %v122 = vld [vmem:[#allocation9 + $0x20] sm:$0xf]
    %v123 = vld [vmem:[#allocation2] sm:$0x1]
    %v124 = vld [vmem:[#allocation11] sm:$0x1]
    %vm125 = vcmask 293888
    %v127 = vsel %vm125, %v123, 0
    %v130 = vsel %vm92, %v122, 0
    %132 = vmatpush.msra.mxu0 0.0
    %133 = vmatpush.msra.mxu0 0.0
    %134 = vmatpush.msra.mxu0 0.0
    %135 = vmatpush.msra.mxu0 0.0
    %136 = vmatpush.msra.mxu0 0.0
    %137 = vmatpush.msra.mxu0 0.0
    %138 = vmatpush.msra.mxu0 0.0
    %139 = vmatpush.msra.mxu0 0.0
    %140 = vmatpush.msra.mxu0 0.0
    %141 = vmatpush.msra.mxu0 0.0
    %142 = vmatpush.msra.mxu0 0.0
    %143 = vmatpush.msra.mxu0 %v130
    %144 = vmatpush.msra.mxu0 %v121
    %145 = vmatpush.msra.mxu0 %v120
    %146 = vmatpush.msra.mxu0 %v119
    %147 = vmatpush.msra.mxu0 %v118
    %148 = vmatmul.f32.gmra.mxu0 %v127
    %v149 = vpop.f32.mrf.mxu0
    %v150 = vadd.f32 0.0, %v149
    %151 = vdwg.mxu0
    %v152 = vadd.f32 %v124, %v150
    %153 = vst.msk [vmem:[#allocation11] sm:$0x1] %vm116, %v152
    %154 = vst.msk [vmem:[#allocation2] sm:$0x1] %vm116, %v152
    // Predicated region
    $region42: #{tpu_custom_call.1} parent=1 // pred_check
      _
    $region43: #{tpu_custom_call.1} parent=1 // pred_check_branch
      %156 = sbr.rel (0) target = $region45
    $region44: #{tpu_custom_call.1} parent=1 // pred_region
      %158 = vsyncadd [#allocation5], 0
      %s160 = sshll.u32 [#allocation11], 4
      %s161 = int_to_ptr.vmem [resolvable:$true] %s160
      %s162 = sshll.u32 %s5, 4
      %s163 = int_to_ptr.hbm [resolvable:$true] %s162
      %165 = dma.vmem_to_hbm [thread:$0]  %s161, 16, %s163, [#allocation5]
    $region45: #{tpu_custom_call.1} parent=1 // pred_fallthru
      _
    // Predicated region
    $region46: #{tpu_custom_call.1} parent=1 // pred_check
      _
    $region47: #{tpu_custom_call.1} parent=1 // pred_check_branch
      %167 = sbr.rel (0) target = $region49
    $region48: #{tpu_custom_call.1} parent=1 // pred_region
      %169 = dma.done [#allocation5], 16
    $region49: #{tpu_custom_call.1} parent=1 // pred_fallthru
      _
    %170 = vsyncpa [#allocation4], 1
    %171 = vsyncpa [#allocation7], 1
    %172 = vsyncpa [#allocation10], 1
    %173 = vsyncpa [#allocation5], 1

</llo_original>
